<compile_context>
chip_gen: v5e
topology: v5e:2x2
jax: 0.10.0
libtpu: 0.0.40
codegen_flags: <defaults>
</compile_context>

<pallas_src>
import functools

import jax
import jax.numpy as jnp
from jax import lax
from jax.experimental import pallas as pl
from jax.experimental.pallas import tpu as pltpu


def _sepconv_kernel(x_ref, dw_ref, b1_ref, pw_ref, b2_ref, out_ref, *,
                    KH, KW, stride, TR, Wo, RIN, mxu_dtype):
    """Grid = (N, Ho // TR): one batch element x one output-row tile per step.

    x_ref  : (1, Cin, Hp, Wp)   padded input (resident across the row-tile axis)
    dw_ref : (KH, KW, Cin, Wo)  depthwise weights, BN1 scale folded in,
                                pre-broadcast along Wo
    b1_ref : (Cin, 1)           folded BN1 bias
    pw_ref : (Cout, Cin)        pointwise weights, BN2 scale folded in
    b2_ref : (Cout, 1)          folded BN2 bias
    out_ref: (1, Cout, TR*Wo)   lane-dense output tile
    """
    t = pl.program_id(1)
    row0 = pl.multiple_of(t * (TR * stride), TR * stride)

    # Padded-input row window needed for this output-row tile.
    x = x_ref[0, :, pl.ds(row0, RIN), :]                    # (Cin, RIN, Wp)
    cin = x.shape[0]

    # ---- depthwise conv (VPU); first tap initialises the accumulator ----
    # TODO(synk): for stride=2 these python strided slices lower to per-tap
    # retiles; a pre-strided DMA row window would avoid that.
    acc = None
    for kh in range(KH):
        for kw in range(KW):
            patch = x[:, kh:kh + (TR - 1) * stride + 1:stride,
                         kw:kw + (Wo - 1) * stride + 1:stride]   # (Cin, TR, Wo)
            tap = patch * dw_ref[kh, kw][:, None, :]             # sublane bcast
            acc = tap if acc is None else acc + tap

    # ---- flatten spatial onto the lane axis; BN1 bias + ReLU6 (lane-dense) ----
    y1 = jnp.clip(acc.reshape(cin, TR * Wo) + b1_ref[...], 0.0, 6.0)

    # ---- pointwise 1x1 conv on the MXU: (Cout, Cin) @ (Cin, TR*Wo) ----
    y2 = jnp.dot(pw_ref[...], y1.astype(mxu_dtype),
                 preferred_element_type=jnp.float32)             # (Cout, TR*Wo)

    # ---- BN2 bias + ReLU6; lane-dense store ----
    out_ref[0] = jnp.clip(y2 + b2_ref[...], 0.0, 6.0)


def _pick_row_tile(Ho, Wo):
    """Smallest divisor TR of Ho whose flattened output tile (TR*Wo) is a
    multiple of 128 lanes; falls back to the full image (always legal)."""
    for tr in range(1, Ho + 1):
        if Ho % tr == 0 and (tr * Wo) % 128 == 0:
            return tr
    return Ho


def sepconv_pallas(x_nchw, dw_w, bn1, pw_w, bn2, *, stride=1, padding=0,
                   mxu_dtype=jnp.float32, eps=1e-5):
    """x_nchw: (N, Cin, H, W) f32.  dw_w: (Cin, KH, KW).  pw_w: (Cout, Cin).
    Returns (N, Cout, Ho, Wo) f32."""
    N, Cin, H, W = x_nchw.shape
    KH, KW = dw_w.shape[1], dw_w.shape[2]
    Cout = pw_w.shape[0]
    Ho = (H + 2 * padding - KH) // stride + 1
    Wo = (W + 2 * padding - KW) // stride + 1

    # Fold BN into per-channel scale/bias; fold the scales into the weights so
    # the kernel only does bias + clip (one-time weight transform).
    g1, be1, m1, v1 = bn1
    s1 = g1 * lax.rsqrt(v1 + eps)
    b1 = be1 - m1 * s1
    g2, be2, m2, v2 = bn2
    s2 = g2 * lax.rsqrt(v2 + eps)
    b2 = be2 - m2 * s2

    # Depthwise weights: (Cin,KH,KW) -> (KH,KW,Cin,Wo), BN1 scale folded in and
    # pre-broadcast along Wo so the in-kernel multiply is a plain sublane
    # broadcast (no per-channel scalar splats).
    dw_k = jnp.broadcast_to(
        (dw_w * s1[:, None, None]).transpose(1, 2, 0)[:, :, :, None],
        (KH, KW, Cin, Wo)).astype(jnp.float32)
    # Pointwise weights: BN2 scale folded into the output rows.
    pw_k = (pw_w * s2[:, None]).astype(mxu_dtype)
    b1_k = b1.reshape(Cin, 1).astype(jnp.float32)
    b2_k = b2.reshape(Cout, 1).astype(jnp.float32)

    # Spatial zero-padding (the only remaining wrapper pass over the
    # activation; the previous version's two transposes are gone).
    x_pad = jnp.pad(x_nchw.astype(jnp.float32),
                    ((0, 0), (0, 0), (padding, padding), (padding, padding)))
    Hp, Wp = x_pad.shape[2], x_pad.shape[3]

    TR = _pick_row_tile(Ho, Wo)           # output rows per grid step
    n_tiles = Ho // TR
    RIN = (TR - 1) * stride + KH          # padded input rows needed per tile

    # Rough per-step VMEM footprint (double-buffered blocks + intermediates);
    # only raise the scoped limit if the default (~32 MiB) would not fit.
    est = (2 * Cin * Hp * Wp * 4 + 2 * Cout * TR * Wo * 4
           + dw_k.size * 4 + pw_k.size * 4
           + 4 * Cin * max(RIN * Wp, TR * Wo) * 4)
    vmem_limit = int(est * 1.5) if est * 1.5 > 32 * 2**20 else None
    # TODO(synk): for very large images the whole padded image is still a
    # single input block; switch to a manually DMA'd row window
    # (memory_space=pl.ANY) if Cin*Hp*Wp ever approaches the 64 MiB v7x VMEM.

    kernel = functools.partial(_sepconv_kernel, KH=KH, KW=KW, stride=stride,
                               TR=TR, Wo=Wo, RIN=RIN, mxu_dtype=mxu_dtype)

    out_flat = pl.pallas_call(
        kernel,
        out_shape=jax.ShapeDtypeStruct((N, Cout, Ho * Wo), jnp.float32),
        grid_spec=pltpu.PrefetchScalarGridSpec(
            num_scalar_prefetch=0,
            grid=(N, n_tiles),
            in_specs=[
                # Full padded image per batch element; constant index along the
                # row-tile axis so it stays resident (no re-DMA per tile).
                pl.BlockSpec((1, Cin, Hp, Wp), lambda n, t: (n, 0, 0, 0)),
                pl.BlockSpec((KH, KW, Cin, Wo), lambda n, t: (0, 0, 0, 0)),
                pl.BlockSpec((Cin, 1), lambda n, t: (0, 0)),
                pl.BlockSpec((Cout, Cin), lambda n, t: (0, 0)),
                pl.BlockSpec((Cout, 1), lambda n, t: (0, 0)),
            ],
            out_specs=pl.BlockSpec((1, Cout, TR * Wo), lambda n, t: (n, 0, t)),
        ),
        compiler_params=pltpu.CompilerParams(
            dimension_semantics=("parallel", "parallel"),
            vmem_limit_bytes=vmem_limit),
    )(x_pad, dw_k, b1_k, pw_k, b2_k)

    # (N, Cout, Ho*Wo) -> NCHW: a free metadata reshape, no transpose.
    return out_flat.reshape(N, Cout, Ho, Wo)


def _reference(x_nchw, dw_w, bn1, pw_w, bn2, *, stride, padding):
    """Pure-JAX reference (lax convs) for correctness checking."""
    eps = 1e-5
    Cin = x_nchw.shape[1]
    Cout = pw_w.shape[0]
    g1, be1, m1, v1 = bn1
    g2, be2, m2, v2 = bn2

    y = lax.conv_general_dilated(
        x_nchw, dw_w.reshape(Cin, 1, dw_w.shape[1], dw_w.shape[2]),
        window_strides=(stride, stride), padding=[(padding, padding)] * 2,
        dimension_numbers=("NCHW", "OIHW", "NCHW"), feature_group_count=Cin)
    y = (y - m1[None, :, None, None]) / jnp.sqrt(v1 + eps)[None, :, None, None]
    y = y * g1[None, :, None, None] + be1[None, :, None, None]
    y = jnp.clip(y, 0.0, 6.0)

    y = lax.conv_general_dilated(
        y, pw_w.reshape(Cout, Cin, 1, 1), window_strides=(1, 1), padding="VALID",
        dimension_numbers=("NCHW", "OIHW", "NCHW"))
    y = (y - m2[None, :, None, None]) / jnp.sqrt(v2 + eps)[None, :, None, None]
    y = y * g2[None, :, None, None] + be2[None, :, None, None]
    return jnp.clip(y, 0.0, 6.0)


if __name__ == "__main__":
    # _SepConv(in=8, out=16, kernel_size=3, stride=1, padding=1)
    N, Cin, H, W = 2, 8, 16, 16
    Cout, K, stride, padding = 16, 3, 1, 1

    key = jax.random.PRNGKey(0)
    k = jax.random.split(key, 8)
    x = jax.random.normal(k[0], (N, Cin, H, W), jnp.float32)
    dw_w = jax.random.normal(k[1], (Cin, K, K), jnp.float32) * 0.2   # (Cin,1,K,K) squeezed
    pw_w = jax.random.normal(k[2], (Cout, Cin), jnp.float32) * 0.2   # (Cout,Cin,1,1) squeezed
    bn1 = (jax.random.uniform(k[3], (Cin,), jnp.float32, 0.5, 1.5),  # gamma
           jax.random.normal(k[4], (Cin,), jnp.float32) * 0.1,       # beta
           jnp.zeros((Cin,), jnp.float32),                           # running_mean
           jnp.ones((Cin,), jnp.float32))                            # running_var
    bn2 = (jax.random.uniform(k[5], (Cout,), jnp.float32, 0.5, 1.5),
           jax.random.normal(k[6], (Cout,), jnp.float32) * 0.1,
           jnp.zeros((Cout,), jnp.float32),
           jnp.ones((Cout,), jnp.float32))

    ref = _reference(x, dw_w, bn1, pw_w, bn2, stride=stride, padding=padding)

    # f32 MXU path (strict check).
    out = sepconv_pallas(x, dw_w, bn1, pw_w, bn2, stride=stride,
                         padding=padding, mxu_dtype=jnp.float32)
    out = jax.block_until_ready(out)
    assert out.shape == (N, Cout, H, W), out.shape
    assert jnp.allclose(out, ref, atol=1e-4, rtol=1e-4), \
        float(jnp.abs(out - ref).max())

    # bf16 MXU path (v6e/v7x fast path; loose tolerance for bf16 operands).
    out_bf16 = sepconv_pallas(x, dw_w, bn1, pw_w, bn2, stride=stride,
                              padding=padding, mxu_dtype=jnp.bfloat16)
    out_bf16 = jax.block_until_ready(out_bf16)
    assert jnp.allclose(out_bf16, ref, atol=5e-2, rtol=5e-2), \
        float(jnp.abs(out_bf16 - ref).max())

    print("KERNEL_OK")
</pallas_src>

<mosaic_0001>
module attributes {stable_mosaic.version = 11 : i64} {
  func.func @_sepconv_kernel(%arg0: i32, %arg1: i32, %arg2: memref<1x8x18x18xf32, #tpu.memory_space<vmem>>, %arg3: memref<3x3x8x16xf32, #tpu.memory_space<vmem>>, %arg4: memref<8x1xf32, #tpu.memory_space<vmem>>, %arg5: memref<16x8xf32, #tpu.memory_space<vmem>>, %arg6: memref<16x1xf32, #tpu.memory_space<vmem>>, %arg7: memref<1x16x128xf32, #tpu.memory_space<vmem>>) attributes {dimension_semantics = [#tpu.dimension_semantics<parallel>, #tpu.dimension_semantics<parallel>], iteration_bounds = array<i64: 2, 2>, scalar_prefetch = 0 : i64, scratch_operands = 0 : i64, tpu.core_type = #tpu.core_type<tc>, window_params = [{transform_indices = @transform_0, window_bounds = array<i64: 1, 8, 18, 18>}, {pipeline_mode = #tpu.pipeline_mode<synchronous>, transform_indices = @transform_1, window_bounds = array<i64: 3, 3, 8, 16>}, {pipeline_mode = #tpu.pipeline_mode<synchronous>, transform_indices = @transform_2, window_bounds = array<i64: 8, 1>}, {pipeline_mode = #tpu.pipeline_mode<synchronous>, transform_indices = @transform_3, window_bounds = array<i64: 16, 8>}, {pipeline_mode = #tpu.pipeline_mode<synchronous>, transform_indices = @transform_4, window_bounds = array<i64: 16, 1>}, {transform_indices = @transform_5, window_bounds = array<i64: 1, 16, 128>}]} {
    %c8_i32 = arith.constant 8 : i32
    %0 = arith.muli %arg1, %c8_i32 : i32
    %1 = tpu.assume_multiple %0, 8 : i32
    %c0 = arith.constant 0 : index
    %c0_0 = arith.constant 0 : index
    %2 = arith.index_cast %1 : i32 to index
    %c0_1 = arith.constant 0 : index
    %3 = vector.load %arg2[%c0, %c0_0, %2, %c0_1] : memref<1x8x18x18xf32, #tpu.memory_space<vmem>>, vector<1x8x10x18xf32>
    %4 = vector.shape_cast %3 : vector<1x8x10x18xf32> to vector<8x10x18xf32>
    %5 = vector.extract_strided_slice %4 {offsets = [0, 0, 0], sizes = [8, 8, 16], strides = [1, 1, 1]} : vector<8x10x18xf32> to vector<8x8x16xf32>
    %c0_2 = arith.constant 0 : index
    %c0_3 = arith.constant 0 : index
    %c0_4 = arith.constant 0 : index
    %c0_5 = arith.constant 0 : index
    %6 = vector.load %arg3[%c0_2, %c0_3, %c0_4, %c0_5] : memref<3x3x8x16xf32, #tpu.memory_space<vmem>>, vector<1x1x8x16xf32>
    %7 = vector.shape_cast %6 : vector<1x1x8x16xf32> to vector<8x16xf32>
    %8 = vector.shape_cast %7 : vector<8x16xf32> to vector<8x1x16xf32>
    %9 = vector.broadcast %8 : vector<8x1x16xf32> to vector<8x8x16xf32>
    %10 = arith.mulf %5, %9 : vector<8x8x16xf32>
    %11 = vector.extract_strided_slice %4 {offsets = [0, 0, 1], sizes = [8, 8, 16], strides = [1, 1, 1]} : vector<8x10x18xf32> to vector<8x8x16xf32>
    %c0_6 = arith.constant 0 : index
    %c1 = arith.constant 1 : index
    %c0_7 = arith.constant 0 : index
    %c0_8 = arith.constant 0 : index
    %12 = vector.load %arg3[%c0_6, %c1, %c0_7, %c0_8] : memref<3x3x8x16xf32, #tpu.memory_space<vmem>>, vector<1x1x8x16xf32>
    %13 = vector.shape_cast %12 : vector<1x1x8x16xf32> to vector<8x16xf32>
    %14 = vector.shape_cast %13 : vector<8x16xf32> to vector<8x1x16xf32>
    %15 = vector.broadcast %14 : vector<8x1x16xf32> to vector<8x8x16xf32>
    %16 = arith.mulf %11, %15 : vector<8x8x16xf32>
    %17 = arith.addf %10, %16 : vector<8x8x16xf32>
    %18 = vector.extract_strided_slice %4 {offsets = [0, 0, 2], sizes = [8, 8, 16], strides = [1, 1, 1]} : vector<8x10x18xf32> to vector<8x8x16xf32>
    %c0_9 = arith.constant 0 : index
    %c2 = arith.constant 2 : index
    %c0_10 = arith.constant 0 : index
    %c0_11 = arith.constant 0 : index
    %19 = vector.load %arg3[%c0_9, %c2, %c0_10, %c0_11] : memref<3x3x8x16xf32, #tpu.memory_space<vmem>>, vector<1x1x8x16xf32>
    %20 = vector.shape_cast %19 : vector<1x1x8x16xf32> to vector<8x16xf32>
    %21 = vector.shape_cast %20 : vector<8x16xf32> to vector<8x1x16xf32>
    %22 = vector.broadcast %21 : vector<8x1x16xf32> to vector<8x8x16xf32>
    %23 = arith.mulf %18, %22 : vector<8x8x16xf32>
    %24 = arith.addf %17, %23 : vector<8x8x16xf32>
    %25 = vector.extract_strided_slice %4 {offsets = [0, 1, 0], sizes = [8, 8, 16], strides = [1, 1, 1]} : vector<8x10x18xf32> to vector<8x8x16xf32>
    %c1_12 = arith.constant 1 : index
    %c0_13 = arith.constant 0 : index
    %c0_14 = arith.constant 0 : index
    %c0_15 = arith.constant 0 : index
    %26 = vector.load %arg3[%c1_12, %c0_13, %c0_14, %c0_15] : memref<3x3x8x16xf32, #tpu.memory_space<vmem>>, vector<1x1x8x16xf32>
    %27 = vector.shape_cast %26 : vector<1x1x8x16xf32> to vector<8x16xf32>
    %28 = vector.shape_cast %27 : vector<8x16xf32> to vector<8x1x16xf32>
    %29 = vector.broadcast %28 : vector<8x1x16xf32> to vector<8x8x16xf32>
    %30 = arith.mulf %25, %29 : vector<8x8x16xf32>
    %31 = arith.addf %24, %30 : vector<8x8x16xf32>
    %32 = vector.extract_strided_slice %4 {offsets = [0, 1, 1], sizes = [8, 8, 16], strides = [1, 1, 1]} : vector<8x10x18xf32> to vector<8x8x16xf32>
    %c1_16 = arith.constant 1 : index
    %c1_17 = arith.constant 1 : index
    %c0_18 = arith.constant 0 : index
    %c0_19 = arith.constant 0 : index
    %33 = vector.load %arg3[%c1_16, %c1_17, %c0_18, %c0_19] : memref<3x3x8x16xf32, #tpu.memory_space<vmem>>, vector<1x1x8x16xf32>
    %34 = vector.shape_cast %33 : vector<1x1x8x16xf32> to vector<8x16xf32>
    %35 = vector.shape_cast %34 : vector<8x16xf32> to vector<8x1x16xf32>
    %36 = vector.broadcast %35 : vector<8x1x16xf32> to vector<8x8x16xf32>
    %37 = arith.mulf %32, %36 : vector<8x8x16xf32>
    %38 = arith.addf %31, %37 : vector<8x8x16xf32>
    %39 = vector.extract_strided_slice %4 {offsets = [0, 1, 2], sizes = [8, 8, 16], strides = [1, 1, 1]} : vector<8x10x18xf32> to vector<8x8x16xf32>
    %c1_20 = arith.constant 1 : index
    %c2_21 = arith.constant 2 : index
    %c0_22 = arith.constant 0 : index
    %c0_23 = arith.constant 0 : index
    %40 = vector.load %arg3[%c1_20, %c2_21, %c0_22, %c0_23] : memref<3x3x8x16xf32, #tpu.memory_space<vmem>>, vector<1x1x8x16xf32>
    %41 = vector.shape_cast %40 : vector<1x1x8x16xf32> to vector<8x16xf32>
    %42 = vector.shape_cast %41 : vector<8x16xf32> to vector<8x1x16xf32>
    %43 = vector.broadcast %42 : vector<8x1x16xf32> to vector<8x8x16xf32>
    %44 = arith.mulf %39, %43 : vector<8x8x16xf32>
    %45 = arith.addf %38, %44 : vector<8x8x16xf32>
    %46 = vector.extract_strided_slice %4 {offsets = [0, 2, 0], sizes = [8, 8, 16], strides = [1, 1, 1]} : vector<8x10x18xf32> to vector<8x8x16xf32>
    %c2_24 = arith.constant 2 : index
    %c0_25 = arith.constant 0 : index
    %c0_26 = arith.constant 0 : index
    %c0_27 = arith.constant 0 : index
    %47 = vector.load %arg3[%c2_24, %c0_25, %c0_26, %c0_27] : memref<3x3x8x16xf32, #tpu.memory_space<vmem>>, vector<1x1x8x16xf32>
    %48 = vector.shape_cast %47 : vector<1x1x8x16xf32> to vector<8x16xf32>
    %49 = vector.shape_cast %48 : vector<8x16xf32> to vector<8x1x16xf32>
    %50 = vector.broadcast %49 : vector<8x1x16xf32> to vector<8x8x16xf32>
    %51 = arith.mulf %46, %50 : vector<8x8x16xf32>
    %52 = arith.addf %45, %51 : vector<8x8x16xf32>
    %53 = vector.extract_strided_slice %4 {offsets = [0, 2, 1], sizes = [8, 8, 16], strides = [1, 1, 1]} : vector<8x10x18xf32> to vector<8x8x16xf32>
    %c2_28 = arith.constant 2 : index
    %c1_29 = arith.constant 1 : index
    %c0_30 = arith.constant 0 : index
    %c0_31 = arith.constant 0 : index
    %54 = vector.load %arg3[%c2_28, %c1_29, %c0_30, %c0_31] : memref<3x3x8x16xf32, #tpu.memory_space<vmem>>, vector<1x1x8x16xf32>
    %55 = vector.shape_cast %54 : vector<1x1x8x16xf32> to vector<8x16xf32>
    %56 = vector.shape_cast %55 : vector<8x16xf32> to vector<8x1x16xf32>
    %57 = vector.broadcast %56 : vector<8x1x16xf32> to vector<8x8x16xf32>
    %58 = arith.mulf %53, %57 : vector<8x8x16xf32>
    %59 = arith.addf %52, %58 : vector<8x8x16xf32>
    %60 = vector.extract_strided_slice %4 {offsets = [0, 2, 2], sizes = [8, 8, 16], strides = [1, 1, 1]} : vector<8x10x18xf32> to vector<8x8x16xf32>
    %c2_32 = arith.constant 2 : index
    %c2_33 = arith.constant 2 : index
    %c0_34 = arith.constant 0 : index
    %c0_35 = arith.constant 0 : index
    %61 = vector.load %arg3[%c2_32, %c2_33, %c0_34, %c0_35] : memref<3x3x8x16xf32, #tpu.memory_space<vmem>>, vector<1x1x8x16xf32>
    %62 = vector.shape_cast %61 : vector<1x1x8x16xf32> to vector<8x16xf32>
    %63 = vector.shape_cast %62 : vector<8x16xf32> to vector<8x1x16xf32>
    %64 = vector.broadcast %63 : vector<8x1x16xf32> to vector<8x8x16xf32>
    %65 = arith.mulf %60, %64 : vector<8x8x16xf32>
    %66 = arith.addf %59, %65 : vector<8x8x16xf32>
    %67 = vector.shape_cast %66 : vector<8x8x16xf32> to vector<8x128xf32>
    %c0_36 = arith.constant 0 : index
    %c0_37 = arith.constant 0 : index
    %68 = vector.load %arg4[%c0_36, %c0_37] : memref<8x1xf32, #tpu.memory_space<vmem>>, vector<8x1xf32>
    %69 = vector.broadcast %68 : vector<8x1xf32> to vector<8x128xf32>
    %70 = arith.addf %67, %69 : vector<8x128xf32>
    %cst = arith.constant 0.000000e+00 : f32
    %cst_38 = arith.constant 6.000000e+00 : f32
    %71 = vector.broadcast %cst : f32 to vector<8x128xf32>
    %72 = arith.maximumf %71, %70 : vector<8x128xf32>
    %73 = vector.broadcast %cst_38 : f32 to vector<8x128xf32>
    %74 = arith.minimumf %73, %72 : vector<8x128xf32>
    %c0_39 = arith.constant 0 : index
    %c0_40 = arith.constant 0 : index
    %75 = vector.load %arg5[%c0_39, %c0_40] : memref<16x8xf32, #tpu.memory_space<vmem>>, vector<16x8xf32>
    %cst_41 = arith.constant dense<0.000000e+00> : vector<16x128xf32>
    %76 = tpu.matmul %75, %74, %cst_41 {dimension_numbers = #tpu.dot_dimension_numbers<[1], [0], [0], [1], [0, 0, 1, 1], [], []>} : vector<16x8xf32>, vector<8x128xf32>, vector<16x128xf32> -> vector<16x128xf32>
    %c0_42 = arith.constant 0 : index
    %c0_43 = arith.constant 0 : index
    %77 = vector.load %arg6[%c0_42, %c0_43] : memref<16x1xf32, #tpu.memory_space<vmem>>, vector<16x1xf32>
    %78 = vector.broadcast %77 : vector<16x1xf32> to vector<16x128xf32>
    %79 = arith.addf %76, %78 : vector<16x128xf32>
    %cst_44 = arith.constant 0.000000e+00 : f32
    %cst_45 = arith.constant 6.000000e+00 : f32
    %80 = vector.broadcast %cst_44 : f32 to vector<16x128xf32>
    %81 = arith.maximumf %80, %79 : vector<16x128xf32>
    %82 = vector.broadcast %cst_45 : f32 to vector<16x128xf32>
    %83 = arith.minimumf %82, %81 : vector<16x128xf32>
    %c0_46 = arith.constant 0 : index
    %c0_47 = arith.constant 0 : index
    %c0_48 = arith.constant 0 : index
    %84 = vector.load %arg7[%c0_46, %c0_47, %c0_48] : memref<1x16x128xf32, #tpu.memory_space<vmem>>, vector<1x16x128xf32>
    %85 = vector.shape_cast %84 : vector<1x16x128xf32> to vector<16x128xf32>
    %86 = vector.shape_cast %83 : vector<16x128xf32> to vector<1x16x128xf32>
    tpu.vector_store %arg7[%c0_46, %c0_47, %c0_48], %86 {strides = array<i32>} : memref<1x16x128xf32, #tpu.memory_space<vmem>>, vector<1x16x128xf32>,
    return
  }
  func.func @transform_0(%arg0: i32, %arg1: i32) -> (i32, i32, i32, i32) {
    %c0_i32 = arith.constant 0 : i32
    %c0_i32_0 = arith.constant 0 : i32
    %c0_i32_1 = arith.constant 0 : i32
    %c0_i32_2 = arith.constant 0 : i32
    return %arg0, %c0_i32, %c0_i32_0, %c0_i32_1 : i32, i32, i32, i32
  }
  func.func @transform_1(%arg0: i32, %arg1: i32) -> (i32, i32, i32, i32) {
    %c0_i32 = arith.constant 0 : i32
    %c0_i32_0 = arith.constant 0 : i32
    %c0_i32_1 = arith.constant 0 : i32
    %c0_i32_2 = arith.constant 0 : i32
    %c0_i32_3 = arith.constant 0 : i32
    return %c0_i32, %c0_i32_0, %c0_i32_1, %c0_i32_2 : i32, i32, i32, i32
  }
  func.func @transform_2(%arg0: i32, %arg1: i32) -> (i32, i32) {
    %c0_i32 = arith.constant 0 : i32
    %c0_i32_0 = arith.constant 0 : i32
    %c0_i32_1 = arith.constant 0 : i32
    return %c0_i32, %c0_i32_0 : i32, i32
  }
  func.func @transform_3(%arg0: i32, %arg1: i32) -> (i32, i32) {
    %c0_i32 = arith.constant 0 : i32
    %c0_i32_0 = arith.constant 0 : i32
    %c0_i32_1 = arith.constant 0 : i32
    return %c0_i32, %c0_i32_0 : i32, i32
  }
  func.func @transform_4(%arg0: i32, %arg1: i32) -> (i32, i32) {
    %c0_i32 = arith.constant 0 : i32
    %c0_i32_0 = arith.constant 0 : i32
    %c0_i32_1 = arith.constant 0 : i32
    return %c0_i32, %c0_i32_0 : i32, i32
  }
  func.func @transform_5(%arg0: i32, %arg1: i32) -> (i32, i32, i32) {
    %c0_i32 = arith.constant 0 : i32
    %c0_i32_0 = arith.constant 0 : i32
    return %arg0, %c0_i32, %arg1 : i32, i32, i32
  }
}

</mosaic_0001>

<llo_original>
// kernel: tpu_custom_call.1
$region0: #{tpu_custom_call.1}
  #allocation0 [shape = 'u32[]', space=smem, size = 0x4, offset = 0x4, fixed_abs, tag = 'smem constant byte address 0x4 - core index']
  #allocation1 [shape = 'u32[72,128]{1,0:T(1,128)}', space=vmem, size = 0x9000, scoped, tag = 'internal scratch']
  %s0 = inlined_call_operand.vmem [shape: f32[2,8,18,18], index: 0, kind: input, shape index: {}]
  %s1 = inlined_call_operand.vmem [shape: f32[3,3,8,16], index: 1, kind: input, shape index: {}]
  %s2 = inlined_call_operand.vmem [shape: f32[8,1], index: 2, kind: input, shape index: {}]
  %s3 = inlined_call_operand.vmem [shape: f32[16,8], index: 3, kind: input, shape index: {}]
  %s4 = inlined_call_operand.vmem [shape: f32[16,1], index: 4, kind: input, shape index: {}]
  %s5 = inlined_call_operand.hbm [shape: f32[2,16,256], index: 5, kind: output, shape index: {}]
  %s6 = sld [smem:[#allocation0]]
  $region53: #{tpu_custom_call.1} parent=0
    _
  %s8 = ssub.s32 1, %s6
  %s9 = scalar_select 0, %s8, %s6
  $region1: #{tpu_custom_call.1} parent=0
    #allocation2 [shape = 'u8[16384]{0}', space=vmem, size = 0x4000, scoped, tag = 'output window, operand 0']
    #allocation3 [shape = 's32[2]{0}', space=sflag, size = 0x8, scoped, tag = 'scoped memory for tpu_custom_call.1']
    %10 = vsyncpa [#allocation3], 0
    %s11 = scalar_lea.sflag [#allocation3], 1
    %12 = vsyncpa %s11, 0
    loop: start=0, step=1, limit=6
    $region2: #{tpu_custom_call.1} parent=1 // loop_pre_header
      _
    $region3: #{tpu_custom_call.1} parent=1 // loop_header
      %s14 = sphi 0, %s18
      %p15 = scmp.ge.s32.totalorder %s14, 6
      %s21 = sphi 0, %s33
      %s22 = sphi 0, %s29
      %s23 = sphi 0, %s21
      %s24 = sphi 0, %s22
      %s25 = sphi 0, %s23
      %s26 = sphi 0, %s24
      %s36 = sphi 0, %s38
      %s39 = sphi 0, %s36
      %s40 = sphi 0, %s39
      %s56 = sphi 0, %s40
      %s60 = sphi 0, %s60
      %s62 = sphi 0, %s60
      %s63 = sphi 0, %s62
      %s77 = sphi 0, %s63
      %s81 = sphi 0, %s81
      %s83 = sphi 0, %s81
      %s84 = sphi 0, %s83
      %s98 = sphi 0, %s84
      %s102 = sphi 0, %s102
      %s104 = sphi 0, %s102
      %s105 = sphi 0, %s104
      %s119 = sphi 0, %s105
      %s123 = sphi 0, %s123
      %s125 = sphi 0, %s123
      %s126 = sphi 0, %s125
      %s140 = sphi 0, %s126
      %s148 = sphi 0, %s150
      %s151 = sphi 0, %s148
      %s152 = sphi 0, %s151
      %s168 = sphi 0, %s152
    $region4: #{tpu_custom_call.1} parent=1 // loop_header_branch
      %17 = sbr.rel (%p15) target = $region8
    $region5: #{tpu_custom_call.1} parent=1 // loop_body
      %s19 = ssub.s32 %s14, 1
      %s20 = ssub.s32 %s14, 2
      %s27 = sadd.s32 1, %s22
      %p28 = scmp.ge.s32.totalorder %s27, 2
      %s29 = scalar_select %p28, 0, %s27
      %s30 = sadd.s32 1, %s21
      %s31 = scalar_select %p28, %s30, %s21
      %p32 = scmp.ge.s32.totalorder %s31, 2
      %s33 = scalar_select %p32, 0, %s31
      %s34 = ssub.s32 %s21, %s33
      %p35 = scmp.eq.s32.totalorder %s34, 0
      %s37 = sadd.s32 %s36, 1
      %s38 = scalar_select %p35, %s36, %s37
      %p41 = pneg %p35
      %p42 = scmp.eq.s32.totalorder %s14, 3
      %p43 = por %p41, %p42
      %p44 = scmp.ne.s32.totalorder %s36, %s39
      %p45 = scmp.eq.s32.totalorder %s14, 0
      %p46 = por %p44, %p45
      %p47 = scmp.ne.s32.totalorder %s36, %s39
      %p48 = scmp.eq.s32.totalorder %s19, 3
      %p49 = por %p47, %p48
      %p50 = scmp.ne.s32.totalorder %s39, %s40
      %p51 = scmp.eq.s32.totalorder %s19, 0
      %p52 = por %p50, %p51
      %p53 = scmp.ne.s32.totalorder %s39, %s40
      %p54 = scmp.eq.s32.totalorder %s20, 3
      %p55 = por %p53, %p54
      %p57 = scmp.ne.s32.totalorder %s40, %s56
      %p58 = scmp.eq.s32.totalorder %s20, 0
      %p59 = por %p57, %p58
      %s61 = sadd.s32 %s60, 1
      %p64 = scmp.eq.s32.totalorder %s14, 3
      %p65 = scmp.ne.s32.totalorder %s60, %s62
      %p66 = scmp.eq.s32.totalorder %s14, 0
      %p67 = por %p65, %p66
      %p68 = scmp.ne.s32.totalorder %s60, %s62
      %p69 = scmp.eq.s32.totalorder %s19, 3
      %p70 = por %p68, %p69
      %p71 = scmp.ne.s32.totalorder %s62, %s63
      %p72 = scmp.eq.s32.totalorder %s19, 0
      %p73 = por %p71, %p72
      %p74 = scmp.ne.s32.totalorder %s62, %s63
      %p75 = scmp.eq.s32.totalorder %s20, 3
      %p76 = por %p74, %p75
      %p78 = scmp.ne.s32.totalorder %s63, %s77
      %p79 = scmp.eq.s32.totalorder %s20, 0
      %p80 = por %p78, %p79
      %s82 = sadd.s32 %s81, 1
      %p85 = scmp.eq.s32.totalorder %s14, 3
      %p86 = scmp.ne.s32.totalorder %s81, %s83
      %p87 = scmp.eq.s32.totalorder %s14, 0
      %p88 = por %p86, %p87
      %p89 = scmp.ne.s32.totalorder %s81, %s83
      %p90 = scmp.eq.s32.totalorder %s19, 3
      %p91 = por %p89, %p90
      %p92 = scmp.ne.s32.totalorder %s83, %s84
      %p93 = scmp.eq.s32.totalorder %s19, 0
      %p94 = por %p92, %p93
      %p95 = scmp.ne.s32.totalorder %s83, %s84
      %p96 = scmp.eq.s32.totalorder %s20, 3
      %p97 = por %p95, %p96
      %p99 = scmp.ne.s32.totalorder %s84, %s98
      %p100 = scmp.eq.s32.totalorder %s20, 0
      %p101 = por %p99, %p100
      %s103 = sadd.s32 %s102, 1
      %p106 = scmp.eq.s32.totalorder %s14, 3
      %p107 = scmp.ne.s32.totalorder %s102, %s104
      %p108 = scmp.eq.s32.totalorder %s14, 0
      %p109 = por %p107, %p108
      %p110 = scmp.ne.s32.totalorder %s102, %s104
      %p111 = scmp.eq.s32.totalorder %s19, 3
      %p112 = por %p110, %p111
      %p113 = scmp.ne.s32.totalorder %s104, %s105
      %p114 = scmp.eq.s32.totalorder %s19, 0
      %p115 = por %p113, %p114
      %p116 = scmp.ne.s32.totalorder %s104, %s105
      %p117 = scmp.eq.s32.totalorder %s20, 3
      %p118 = por %p116, %p117
      %p120 = scmp.ne.s32.totalorder %s105, %s119
      %p121 = scmp.eq.s32.totalorder %s20, 0
      %p122 = por %p120, %p121
      %s124 = sadd.s32 %s123, 1
      %p127 = scmp.eq.s32.totalorder %s14, 3
      %p128 = scmp.ne.s32.totalorder %s123, %s125
      %p129 = scmp.eq.s32.totalorder %s14, 0
      %p130 = por %p128, %p129
      %p131 = scmp.ne.s32.totalorder %s123, %s125
      %p132 = scmp.eq.s32.totalorder %s19, 3
      %p133 = por %p131, %p132
      %p134 = scmp.ne.s32.totalorder %s125, %s126
      %p135 = scmp.eq.s32.totalorder %s19, 0
      %p136 = por %p134, %p135
      %p137 = scmp.ne.s32.totalorder %s125, %s126
      %p138 = scmp.eq.s32.totalorder %s20, 3
      %p139 = por %p137, %p138
      %p141 = scmp.ne.s32.totalorder %s126, %s140
      %p142 = scmp.eq.s32.totalorder %s20, 0
      %p143 = por %p141, %p142
      %s144 = ssub.s32 %s21, %s33
      %s145 = ssub.s32 %s22, %s29
      %s146 = sor.u32 %s144, %s145
      %p147 = scmp.eq.s32.totalorder %s146, 0
      %s149 = sadd.s32 %s148, 1
      %s150 = scalar_select %p147, %s148, %s149
      %p153 = pneg %p147
      %p154 = scmp.eq.s32.totalorder %s14, 3
      %p155 = por %p153, %p154
      %p156 = scmp.ne.s32.totalorder %s148, %s151
      %p157 = scmp.eq.s32.totalorder %s14, 0
      %p158 = por %p156, %p157
      %p159 = scmp.ne.s32.totalorder %s148, %s151
      %p160 = scmp.eq.s32.totalorder %s19, 3
      %p161 = por %p159, %p160
      %p162 = scmp.ne.s32.totalorder %s151, %s152
      %p163 = scmp.eq.s32.totalorder %s19, 0
      %p164 = por %p162, %p163
      %p165 = scmp.ne.s32.totalorder %s151, %s152
      %p166 = scmp.eq.s32.totalorder %s20, 3
      %p167 = por %p165, %p166
      %p169 = scmp.ne.s32.totalorder %s152, %s168
      %p170 = scmp.eq.s32.totalorder %s20, 0
      %p171 = por %p169, %p170
      %p172 = scmp.le.s32.totalorder 1, %s14
      %p173 = scmp.lt.s32.totalorder %s14, 5
      %p174 = pnand %p172, %p173
      %p175 = pneg %p174
      // Predicated region
      $region9: #{tpu_custom_call.1} parent=5 // pred_check
        _
      $region10: #{tpu_custom_call.1} parent=5 // pred_check_branch
        %177 = sbr.rel (%p174) target = $region12
      $region11: #{tpu_custom_call.1} parent=5 // pred_region
        %s178 = ssub.s32 %s14, 1
        // Predicated region
        $region13: #{tpu_custom_call.1} parent=11 // pred_check
          %p179 = pneg %p73
        $region14: #{tpu_custom_call.1} parent=11 // pred_check_branch
          %181 = sbr.rel (%p179) target = $region16
        $region15: #{tpu_custom_call.1} parent=11 // pred_region
          _
        $region16: #{tpu_custom_call.1} parent=11 // pred_fallthru
          _
        // Predicated region
        $region17: #{tpu_custom_call.1} parent=11 // pred_check
          %p182 = pneg %p94
        $region18: #{tpu_custom_call.1} parent=11 // pred_check_branch
          %184 = sbr.rel (%p182) target = $region20
        $region19: #{tpu_custom_call.1} parent=11 // pred_region
          _
        $region20: #{tpu_custom_call.1} parent=11 // pred_fallthru
          _
        // Predicated region
        $region21: #{tpu_custom_call.1} parent=11 // pred_check
          %p185 = pneg %p115
        $region22: #{tpu_custom_call.1} parent=11 // pred_check_branch
          %187 = sbr.rel (%p185) target = $region24
        $region23: #{tpu_custom_call.1} parent=11 // pred_region
          _
        $region24: #{tpu_custom_call.1} parent=11 // pred_fallthru
          _
        // Predicated region
        $region25: #{tpu_custom_call.1} parent=11 // pred_check
          %p188 = pneg %p136
        $region26: #{tpu_custom_call.1} parent=11 // pred_check_branch
          %190 = sbr.rel (%p188) target = $region28
        $region27: #{tpu_custom_call.1} parent=11 // pred_region
          _
        $region28: #{tpu_custom_call.1} parent=11 // pred_fallthru
          _
      $region12: #{tpu_custom_call.1} parent=5 // pred_fallthru
        _
      %p191 = scmp.lt.s32.totalorder %s14, 4
      // Predicated region
      $region29: #{tpu_custom_call.1} parent=5 // pred_check
        %p192 = pneg %p191
      $region30: #{tpu_custom_call.1} parent=5 // pred_check_branch
        %194 = sbr.rel (%p192) target = $region32
      $region31: #{tpu_custom_call.1} parent=5 // pred_region
        // Predicated region
        $region33: #{tpu_custom_call.1} parent=31 // pred_check
          %p195 = pneg %p46
        $region34: #{tpu_custom_call.1} parent=31 // pred_check_branch
          %197 = sbr.rel (%p195) target = $region36
        $region35: #{tpu_custom_call.1} parent=31 // pred_region
          %p198 = scmp.lt.s32.totalorder %s21, 1
          %s199 = scalar_select %p198, %s21, 1
          %s200 = smul.addr %s199, 24
          %s201 = smul.addr %s200, 8
          %s202 = scalar_lea.vmem %s0, %s201
        $region36: #{tpu_custom_call.1} parent=31 // pred_fallthru
          _
      $region32: #{tpu_custom_call.1} parent=5 // pred_fallthru
        _
      %p203 = scmp.le.s32.totalorder 1, %s14
      %p204 = scmp.lt.s32.totalorder %s14, 5
      %p205 = pnand %p203, %p204
      %p206 = pneg %p205
      // Predicated region
      $region37: #{tpu_custom_call.1} parent=5 // pred_check
        _
      $region38: #{tpu_custom_call.1} parent=5 // pred_check_branch
        %208 = sbr.rel (%p205) target = $region40
      $region39: #{tpu_custom_call.1} parent=5 // pred_region
        %s209 = ssub.s32 %s14, 1
        %p210 = scmp.lt.s32.totalorder %s23, 1
        %s211 = scalar_select %p210, %s23, 1
        %s212 = smul.addr %s211, 24
        %s213 = smul.addr %s212, 8
        %s214 = scalar_lea.vmem %s0, %s213
        %p215 = pneg %p52
        %p216 = pneg %p49
        %p217 = pneg %p73
        %p218 = pneg %p70
        %p219 = pneg %p94
        %p220 = pneg %p91
        %p221 = pneg %p115
        %p222 = pneg %p112
        %p223 = pneg %p136
        %p224 = pneg %p133
        %p225 = pneg %p164
        %p226 = pneg %p161
        %s227 = sand.u32 %s151, 1
        %s228 = scalar_lea.sflag [#allocation3], %s227
        %s229 = sand.u32 %s151, 1
        %s230 = smul.addr %s229, 16
        %s231 = scalar_lea.vmem [#allocation2], %s230
        %p232 = scmp.lt.s32.totalorder %s23, 1
        %s233 = scalar_select %p232, %s23, 1
        %s234 = smul.addr %s233, 24
        %s235 = smul.addr %s234, 8
        %s236 = scalar_lea.vmem %s0, %s235
        %s237 = smul.u32 %s24, 8
        %s238 = scalar_lea.vmem %s236, %s237
        %v239 = vld [vmem:[%s238] sm:$0xff]
        %v240 = vld [vmem:[%s238 + $0x8] sm:$0x3]
        %v241 = vld [vmem:[%s238 + $0x18] sm:$0xff]
        %v242 = vld [vmem:[%s238 + $0x20] sm:$0x3]
        %v243 = vld [vmem:[%s238 + $0x30] sm:$0xff]
        %v244 = vld [vmem:[%s238 + $0x38] sm:$0x3]
        %v245 = vld [vmem:[%s238 + $0x48] sm:$0xff]
        %v246 = vld [vmem:[%s238 + $0x50] sm:$0x3]
        %v247 = vld [vmem:[%s238 + $0x60] sm:$0xff]
        %v248 = vld [vmem:[%s238 + $0x68] sm:$0x3]
        %v249 = vld [vmem:[%s238 + $0x78] sm:$0xff]
        %v250 = vld [vmem:[%s238 + $0x80] sm:$0x3]
        %v251 = vld [vmem:[%s238 + $0x90] sm:$0xff]
        %v252 = vld [vmem:[%s238 + $0x98] sm:$0x3]
        %v253 = vld [vmem:[%s238 + $0xa8] sm:$0xff]
        %v254 = vld [vmem:[%s238 + $0xb0] sm:$0x3]
        %v255 = vld [vmem:[%s1] sm:$0xff]
        %v257 = vrot.slane %v255, 1
        %v258 = vrot.slane %v255, 2
        %v259 = vrot.slane %v255, 3
        %v260 = vrot.slane %v255, 4
        %v261 = vrot.slane %v255, 5
        %v262 = vrot.slane %v255, 6
        %v263 = vrot.slane %v255, 7
        %v264 = vperm.slane %v255, 0
        %v265 = vperm.slane %v257, 0
        %v266 = vperm.slane %v258, 0
        %v267 = vperm.slane %v259, 0
        %v268 = vperm.slane %v260, 0
        %v269 = vperm.slane %v261, 0
        %v270 = vperm.slane %v262, 0
        %v271 = vperm.slane %v263, 0
        %v280 = vmul.f32 %v239, %v264
        %v281 = vmul.f32 %v241, %v265
        %v282 = vmul.f32 %v243, %v266
        %v283 = vmul.f32 %v245, %v267
        %v284 = vmul.f32 %v247, %v268
        %v285 = vmul.f32 %v249, %v269
        %v286 = vmul.f32 %v251, %v270
        %v287 = vmul.f32 %v253, %v271
        %s288 = scalar_lea.vmem %s1, 8
        %v289 = vld [vmem:[%s288] sm:$0xff]
        %v291 = vrot.slane %v289, 1
        %v292 = vrot.slane %v289, 2
        %v293 = vrot.slane %v289, 3
        %v294 = vrot.slane %v289, 4
        %v295 = vrot.slane %v289, 5
        %v296 = vrot.slane %v289, 6
        %v297 = vrot.slane %v289, 7
        %v298 = vperm.slane %v289, 0
        %v299 = vperm.slane %v291, 0
        %v300 = vperm.slane %v292, 0
        %v301 = vperm.slane %v293, 0
        %v302 = vperm.slane %v294, 0
        %v303 = vperm.slane %v295, 0
        %v304 = vperm.slane %v296, 0
        %v305 = vperm.slane %v297, 0
        %306 = vrot.lane.b32.xlu0 %v298, 1
        %v307 = vpop.permute.xlu0 %306
        %308 = vrot.lane.b32.xlu0 %v299, 1
        %v309 = vpop.permute.xlu0 %308
        %310 = vrot.lane.b32.xlu0 %v300, 1
        %v311 = vpop.permute.xlu0 %310
        %312 = vrot.lane.b32.xlu0 %v301, 1
        %v313 = vpop.permute.xlu0 %312
        %314 = vrot.lane.b32.xlu0 %v302, 1
        %v315 = vpop.permute.xlu0 %314
        %316 = vrot.lane.b32.xlu0 %v303, 1
        %v317 = vpop.permute.xlu0 %316
        %318 = vrot.lane.b32.xlu0 %v304, 1
        %v319 = vpop.permute.xlu0 %318
        %320 = vrot.lane.b32.xlu0 %v305, 1
        %v321 = vpop.permute.xlu0 %320
        %v330 = vmul.f32 %v239, %v307
        %v331 = vmul.f32 %v241, %v309
        %v332 = vmul.f32 %v243, %v311
        %v333 = vmul.f32 %v245, %v313
        %v334 = vmul.f32 %v247, %v315
        %v335 = vmul.f32 %v249, %v317
        %v336 = vmul.f32 %v251, %v319
        %v337 = vmul.f32 %v253, %v321
        %346 = vrot.lane.b32.xlu0 %v330, 127
        %v347 = vpop.permute.xlu0 %346
        %348 = vrot.lane.b32.xlu0 %v331, 127
        %v349 = vpop.permute.xlu0 %348
        %350 = vrot.lane.b32.xlu0 %v332, 127
        %v351 = vpop.permute.xlu0 %350
        %352 = vrot.lane.b32.xlu0 %v333, 127
        %v353 = vpop.permute.xlu0 %352
        %354 = vrot.lane.b32.xlu0 %v334, 127
        %v355 = vpop.permute.xlu0 %354
        %356 = vrot.lane.b32.xlu0 %v335, 127
        %v357 = vpop.permute.xlu0 %356
        %358 = vrot.lane.b32.xlu0 %v336, 127
        %v359 = vpop.permute.xlu0 %358
        %360 = vrot.lane.b32.xlu0 %v337, 127
        %v361 = vpop.permute.xlu0 %360
        %v370 = vadd.f32 %v280, %v347
        %v371 = vadd.f32 %v281, %v349
        %v372 = vadd.f32 %v282, %v351
        %v373 = vadd.f32 %v283, %v353
        %v374 = vadd.f32 %v284, %v355
        %v375 = vadd.f32 %v285, %v357
        %v376 = vadd.f32 %v286, %v359
        %v377 = vadd.f32 %v287, %v361
        %s378 = scalar_lea.vmem %s1, 16
        %v379 = vld [vmem:[%s378] sm:$0xff]
        %v381 = vrot.slane %v379, 1
        %v382 = vrot.slane %v379, 2
        %v383 = vrot.slane %v379, 3
        %v384 = vrot.slane %v379, 4
        %v385 = vrot.slane %v379, 5
        %v386 = vrot.slane %v379, 6
        %v387 = vrot.slane %v379, 7
        %v388 = vperm.slane %v379, 0
        %v389 = vperm.slane %v381, 0
        %v390 = vperm.slane %v382, 0
        %v391 = vperm.slane %v383, 0
        %v392 = vperm.slane %v384, 0
        %v393 = vperm.slane %v385, 0
        %v394 = vperm.slane %v386, 0
        %v395 = vperm.slane %v387, 0
        %396 = vrot.lane.b32.xlu0 %v388, 2
        %v397 = vpop.permute.xlu0 %396
        %398 = vrot.lane.b32.xlu0 %v389, 2
        %v399 = vpop.permute.xlu0 %398
        %400 = vrot.lane.b32.xlu0 %v390, 2
        %v401 = vpop.permute.xlu0 %400
        %402 = vrot.lane.b32.xlu0 %v391, 2
        %v403 = vpop.permute.xlu0 %402
        %404 = vrot.lane.b32.xlu0 %v392, 2
        %v405 = vpop.permute.xlu0 %404
        %406 = vrot.lane.b32.xlu0 %v393, 2
        %v407 = vpop.permute.xlu0 %406
        %408 = vrot.lane.b32.xlu0 %v394, 2
        %v409 = vpop.permute.xlu0 %408
        %410 = vrot.lane.b32.xlu0 %v395, 2
        %v411 = vpop.permute.xlu0 %410
        %v420 = vmul.f32 %v239, %v397
        %v421 = vmul.f32 %v241, %v399
        %v422 = vmul.f32 %v243, %v401
        %v423 = vmul.f32 %v245, %v403
        %v424 = vmul.f32 %v247, %v405
        %v425 = vmul.f32 %v249, %v407
        %v426 = vmul.f32 %v251, %v409
        %v427 = vmul.f32 %v253, %v411
        %436 = vrot.lane.b32.xlu0 %v420, 126
        %v437 = vpop.permute.xlu0 %436
        %438 = vrot.lane.b32.xlu0 %v421, 126
        %v439 = vpop.permute.xlu0 %438
        %440 = vrot.lane.b32.xlu0 %v422, 126
        %v441 = vpop.permute.xlu0 %440
        %442 = vrot.lane.b32.xlu0 %v423, 126
        %v443 = vpop.permute.xlu0 %442
        %444 = vrot.lane.b32.xlu0 %v424, 126
        %v445 = vpop.permute.xlu0 %444
        %446 = vrot.lane.b32.xlu0 %v425, 126
        %v447 = vpop.permute.xlu0 %446
        %448 = vrot.lane.b32.xlu0 %v426, 126
        %v449 = vpop.permute.xlu0 %448
        %450 = vrot.lane.b32.xlu0 %v427, 126
        %v451 = vpop.permute.xlu0 %450
        %v460 = vadd.f32 %v370, %v437
        %v461 = vadd.f32 %v371, %v439
        %v462 = vadd.f32 %v372, %v441
        %v463 = vadd.f32 %v373, %v443
        %v464 = vadd.f32 %v374, %v445
        %v465 = vadd.f32 %v375, %v447
        %v466 = vadd.f32 %v376, %v449
        %v467 = vadd.f32 %v377, %v451
        %s468 = scalar_lea.vmem %s1, 24
        %v469 = vld [vmem:[%s468] sm:$0xff]
        %v471 = vrot.slane %v469, 1
        %v472 = vrot.slane %v469, 2
        %v473 = vrot.slane %v469, 3
        %v474 = vrot.slane %v469, 4
        %v475 = vrot.slane %v469, 5
        %v476 = vrot.slane %v469, 6
        %v477 = vrot.slane %v469, 7
        %v478 = vperm.slane %v469, 0
        %v479 = vperm.slane %v471, 0
        %v480 = vperm.slane %v472, 0
        %v481 = vperm.slane %v473, 0
        %v482 = vperm.slane %v474, 0
        %v483 = vperm.slane %v475, 0
        %v484 = vperm.slane %v476, 0
        %v485 = vperm.slane %v477, 0
        %v494 = vmul.f32 %v239, %v478
        %v495 = vmul.f32 %v240, %v478
        %v496 = vmul.f32 %v241, %v479
        %v497 = vmul.f32 %v242, %v479
        %v498 = vmul.f32 %v243, %v480
        %v499 = vmul.f32 %v244, %v480
        %v500 = vmul.f32 %v245, %v481
        %v501 = vmul.f32 %v246, %v481
        %v502 = vmul.f32 %v247, %v482
        %v503 = vmul.f32 %v248, %v482
        %v504 = vmul.f32 %v249, %v483
        %v505 = vmul.f32 %v250, %v483
        %v506 = vmul.f32 %v251, %v484
        %v507 = vmul.f32 %v252, %v484
        %v508 = vmul.f32 %v253, %v485
        %v509 = vmul.f32 %v254, %v485
        %vm526 = vcmask 1046528
        %v527 = vrot.slane %v494, 1
        %v528 = vrot.slane %v495, 1
        %v529 = vsel %vm526, %v527, %v528
        %v530 = vrot.slane %v496, 1
        %v531 = vrot.slane %v497, 1
        %v532 = vsel %vm526, %v530, %v531
        %v533 = vrot.slane %v498, 1
        %v534 = vrot.slane %v499, 1
        %v535 = vsel %vm526, %v533, %v534
        %v536 = vrot.slane %v500, 1
        %v537 = vrot.slane %v501, 1
        %v538 = vsel %vm526, %v536, %v537
        %v539 = vrot.slane %v502, 1
        %v540 = vrot.slane %v503, 1
        %v541 = vsel %vm526, %v539, %v540
        %v542 = vrot.slane %v504, 1
        %v543 = vrot.slane %v505, 1
        %v544 = vsel %vm526, %v542, %v543
        %v545 = vrot.slane %v506, 1
        %v546 = vrot.slane %v507, 1
        %v547 = vsel %vm526, %v545, %v546
        %v548 = vrot.slane %v508, 1
        %v549 = vrot.slane %v509, 1
        %v550 = vsel %vm526, %v548, %v549
        %v559 = vadd.f32 %v460, %v529
        %v560 = vadd.f32 %v461, %v532
        %v561 = vadd.f32 %v462, %v535
        %v562 = vadd.f32 %v463, %v538
        %v563 = vadd.f32 %v464, %v541
        %v564 = vadd.f32 %v465, %v544
        %v565 = vadd.f32 %v466, %v547
        %v566 = vadd.f32 %v467, %v550
        %s567 = scalar_lea.vmem %s1, 32
        %v568 = vld [vmem:[%s567] sm:$0xff]
        %v570 = vrot.slane %v568, 1
        %v571 = vrot.slane %v568, 2
        %v572 = vrot.slane %v568, 3
        %v573 = vrot.slane %v568, 4
        %v574 = vrot.slane %v568, 5
        %v575 = vrot.slane %v568, 6
        %v576 = vrot.slane %v568, 7
        %v577 = vperm.slane %v568, 0
        %v578 = vperm.slane %v570, 0
        %v579 = vperm.slane %v571, 0
        %v580 = vperm.slane %v572, 0
        %v581 = vperm.slane %v573, 0
        %v582 = vperm.slane %v574, 0
        %v583 = vperm.slane %v575, 0
        %v584 = vperm.slane %v576, 0
        %585 = vrot.lane.b32.xlu0 %v577, 1
        %v586 = vpop.permute.xlu0 %585
        %587 = vrot.lane.b32.xlu0 %v578, 1
        %v588 = vpop.permute.xlu0 %587
        %589 = vrot.lane.b32.xlu0 %v579, 1
        %v590 = vpop.permute.xlu0 %589
        %591 = vrot.lane.b32.xlu0 %v580, 1
        %v592 = vpop.permute.xlu0 %591
        %593 = vrot.lane.b32.xlu0 %v581, 1
        %v594 = vpop.permute.xlu0 %593
        %595 = vrot.lane.b32.xlu0 %v582, 1
        %v596 = vpop.permute.xlu0 %595
        %597 = vrot.lane.b32.xlu0 %v583, 1
        %v598 = vpop.permute.xlu0 %597
        %599 = vrot.lane.b32.xlu0 %v584, 1
        %v600 = vpop.permute.xlu0 %599
        %v609 = vmul.f32 %v239, %v586
        %v610 = vmul.f32 %v240, %v586
        %v611 = vmul.f32 %v241, %v588
        %v612 = vmul.f32 %v242, %v588
        %v613 = vmul.f32 %v243, %v590
        %v614 = vmul.f32 %v244, %v590
        %v615 = vmul.f32 %v245, %v592
        %v616 = vmul.f32 %v246, %v592
        %v617 = vmul.f32 %v247, %v594
        %v618 = vmul.f32 %v248, %v594
        %v619 = vmul.f32 %v249, %v596
        %v620 = vmul.f32 %v250, %v596
        %v621 = vmul.f32 %v251, %v598
        %v622 = vmul.f32 %v252, %v598
        %v623 = vmul.f32 %v253, %v600
        %v624 = vmul.f32 %v254, %v600
        %v641 = vrot.slane %v609, 1
        %v642 = vrot.slane %v610, 1
        %v643 = vsel %vm526, %v641, %v642
        %v644 = vrot.slane %v611, 1
        %v645 = vrot.slane %v612, 1
        %v646 = vsel %vm526, %v644, %v645
        %v647 = vrot.slane %v613, 1
        %v648 = vrot.slane %v614, 1
        %v649 = vsel %vm526, %v647, %v648
        %v650 = vrot.slane %v615, 1
        %v651 = vrot.slane %v616, 1
        %v652 = vsel %vm526, %v650, %v651
        %v653 = vrot.slane %v617, 1
        %v654 = vrot.slane %v618, 1
        %v655 = vsel %vm526, %v653, %v654
        %v656 = vrot.slane %v619, 1
        %v657 = vrot.slane %v620, 1
        %v658 = vsel %vm526, %v656, %v657
        %v659 = vrot.slane %v621, 1
        %v660 = vrot.slane %v622, 1
        %v661 = vsel %vm526, %v659, %v660
        %v662 = vrot.slane %v623, 1
        %v663 = vrot.slane %v624, 1
        %v664 = vsel %vm526, %v662, %v663
        %665 = vrot.lane.b32.xlu0 %v643, 127
        %v666 = vpop.permute.xlu0 %665
        %667 = vrot.lane.b32.xlu0 %v646, 127
        %v668 = vpop.permute.xlu0 %667
        %669 = vrot.lane.b32.xlu0 %v649, 127
        %v670 = vpop.permute.xlu0 %669
        %671 = vrot.lane.b32.xlu0 %v652, 127
        %v672 = vpop.permute.xlu0 %671
        %673 = vrot.lane.b32.xlu0 %v655, 127
        %v674 = vpop.permute.xlu0 %673
        %675 = vrot.lane.b32.xlu0 %v658, 127
        %v676 = vpop.permute.xlu0 %675
        %677 = vrot.lane.b32.xlu0 %v661, 127
        %v678 = vpop.permute.xlu0 %677
        %679 = vrot.lane.b32.xlu0 %v664, 127
        %v680 = vpop.permute.xlu0 %679
        %v689 = vadd.f32 %v559, %v666
        %v690 = vadd.f32 %v560, %v668
        %v691 = vadd.f32 %v561, %v670
        %v692 = vadd.f32 %v562, %v672
        %v693 = vadd.f32 %v563, %v674
        %v694 = vadd.f32 %v564, %v676
        %v695 = vadd.f32 %v565, %v678
        %v696 = vadd.f32 %v566, %v680
        %s697 = scalar_lea.vmem %s1, 40
        %v698 = vld [vmem:[%s697] sm:$0xff]
        %v700 = vrot.slane %v698, 1
        %v701 = vrot.slane %v698, 2
        %v702 = vrot.slane %v698, 3
        %v703 = vrot.slane %v698, 4
        %v704 = vrot.slane %v698, 5
        %v705 = vrot.slane %v698, 6
        %v706 = vrot.slane %v698, 7
        %v707 = vperm.slane %v698, 0
        %v708 = vperm.slane %v700, 0
        %v709 = vperm.slane %v701, 0
        %v710 = vperm.slane %v702, 0
        %v711 = vperm.slane %v703, 0
        %v712 = vperm.slane %v704, 0
        %v713 = vperm.slane %v705, 0
        %v714 = vperm.slane %v706, 0
        %715 = vrot.lane.b32.xlu0 %v707, 2
        %v716 = vpop.permute.xlu0 %715
        %717 = vrot.lane.b32.xlu0 %v708, 2
        %v718 = vpop.permute.xlu0 %717
        %719 = vrot.lane.b32.xlu0 %v709, 2
        %v720 = vpop.permute.xlu0 %719
        %721 = vrot.lane.b32.xlu0 %v710, 2
        %v722 = vpop.permute.xlu0 %721
        %723 = vrot.lane.b32.xlu0 %v711, 2
        %v724 = vpop.permute.xlu0 %723
        %725 = vrot.lane.b32.xlu0 %v712, 2
        %v726 = vpop.permute.xlu0 %725
        %727 = vrot.lane.b32.xlu0 %v713, 2
        %v728 = vpop.permute.xlu0 %727
        %729 = vrot.lane.b32.xlu0 %v714, 2
        %v730 = vpop.permute.xlu0 %729
        %v739 = vmul.f32 %v239, %v716
        %v740 = vmul.f32 %v240, %v716
        %v741 = vmul.f32 %v241, %v718
        %v742 = vmul.f32 %v242, %v718
        %v743 = vmul.f32 %v243, %v720
        %v744 = vmul.f32 %v244, %v720
        %v745 = vmul.f32 %v245, %v722
        %v746 = vmul.f32 %v246, %v722
        %v747 = vmul.f32 %v247, %v724
        %v748 = vmul.f32 %v248, %v724
        %v749 = vmul.f32 %v249, %v726
        %v750 = vmul.f32 %v250, %v726
        %v751 = vmul.f32 %v251, %v728
        %v752 = vmul.f32 %v252, %v728
        %v753 = vmul.f32 %v253, %v730
        %v754 = vmul.f32 %v254, %v730
        %v771 = vrot.slane %v739, 1
        %v772 = vrot.slane %v740, 1
        %v773 = vsel %vm526, %v771, %v772
        %v774 = vrot.slane %v741, 1
        %v775 = vrot.slane %v742, 1
        %v776 = vsel %vm526, %v774, %v775
        %v777 = vrot.slane %v743, 1
        %v778 = vrot.slane %v744, 1
        %v779 = vsel %vm526, %v777, %v778
        %v780 = vrot.slane %v745, 1
        %v781 = vrot.slane %v746, 1
        %v782 = vsel %vm526, %v780, %v781
        %v783 = vrot.slane %v747, 1
        %v784 = vrot.slane %v748, 1
        %v785 = vsel %vm526, %v783, %v784
        %v786 = vrot.slane %v749, 1
        %v787 = vrot.slane %v750, 1
        %v788 = vsel %vm526, %v786, %v787
        %v789 = vrot.slane %v751, 1
        %v790 = vrot.slane %v752, 1
        %v791 = vsel %vm526, %v789, %v790
        %v792 = vrot.slane %v753, 1
        %v793 = vrot.slane %v754, 1
        %v794 = vsel %vm526, %v792, %v793
        %795 = vrot.lane.b32.xlu0 %v773, 126
        %v796 = vpop.permute.xlu0 %795
        %797 = vrot.lane.b32.xlu0 %v776, 126
        %v798 = vpop.permute.xlu0 %797
        %799 = vrot.lane.b32.xlu0 %v779, 126
        %v800 = vpop.permute.xlu0 %799
        %801 = vrot.lane.b32.xlu0 %v782, 126
        %v802 = vpop.permute.xlu0 %801
        %803 = vrot.lane.b32.xlu0 %v785, 126
        %v804 = vpop.permute.xlu0 %803
        %805 = vrot.lane.b32.xlu0 %v788, 126
        %v806 = vpop.permute.xlu0 %805
        %807 = vrot.lane.b32.xlu0 %v791, 126
        %v808 = vpop.permute.xlu0 %807
        %809 = vrot.lane.b32.xlu0 %v794, 126
        %v810 = vpop.permute.xlu0 %809
        %v819 = vadd.f32 %v689, %v796
        %v820 = vadd.f32 %v690, %v798
        %v821 = vadd.f32 %v691, %v800
        %v822 = vadd.f32 %v692, %v802
        %v823 = vadd.f32 %v693, %v804
        %v824 = vadd.f32 %v694, %v806
        %v825 = vadd.f32 %v695, %v808
        %v826 = vadd.f32 %v696, %v810
        %s827 = scalar_lea.vmem %s1, 48
        %v828 = vld [vmem:[%s827] sm:$0xff]
        %v830 = vrot.slane %v828, 1
        %v831 = vrot.slane %v828, 2
        %v832 = vrot.slane %v828, 3
        %v833 = vrot.slane %v828, 4
        %v834 = vrot.slane %v828, 5
        %v835 = vrot.slane %v828, 6
        %v836 = vrot.slane %v828, 7
        %v837 = vperm.slane %v828, 0
        %v838 = vperm.slane %v830, 0
        %v839 = vperm.slane %v831, 0
        %v840 = vperm.slane %v832, 0
        %v841 = vperm.slane %v833, 0
        %v842 = vperm.slane %v834, 0
        %v843 = vperm.slane %v835, 0
        %v844 = vperm.slane %v836, 0
        %v853 = vmul.f32 %v239, %v837
        %v854 = vmul.f32 %v240, %v837
        %v855 = vmul.f32 %v241, %v838
        %v856 = vmul.f32 %v242, %v838
        %v857 = vmul.f32 %v243, %v839
        %v858 = vmul.f32 %v244, %v839
        %v859 = vmul.f32 %v245, %v840
        %v860 = vmul.f32 %v246, %v840
        %v861 = vmul.f32 %v247, %v841
        %v862 = vmul.f32 %v248, %v841
        %v863 = vmul.f32 %v249, %v842
        %v864 = vmul.f32 %v250, %v842
        %v865 = vmul.f32 %v251, %v843
        %v866 = vmul.f32 %v252, %v843
        %v867 = vmul.f32 %v253, %v844
        %v868 = vmul.f32 %v254, %v844
        %vm885 = vcmask 1045504
        %v886 = vrot.slane %v853, 2
        %v887 = vrot.slane %v854, 2
        %v888 = vsel %vm885, %v886, %v887
        %v889 = vrot.slane %v855, 2
        %v890 = vrot.slane %v856, 2
        %v891 = vsel %vm885, %v889, %v890
        %v892 = vrot.slane %v857, 2
        %v893 = vrot.slane %v858, 2
        %v894 = vsel %vm885, %v892, %v893
        %v895 = vrot.slane %v859, 2
        %v896 = vrot.slane %v860, 2
        %v897 = vsel %vm885, %v895, %v896
        %v898 = vrot.slane %v861, 2
        %v899 = vrot.slane %v862, 2
        %v900 = vsel %vm885, %v898, %v899
        %v901 = vrot.slane %v863, 2
        %v902 = vrot.slane %v864, 2
        %v903 = vsel %vm885, %v901, %v902
        %v904 = vrot.slane %v865, 2
        %v905 = vrot.slane %v866, 2
        %v906 = vsel %vm885, %v904, %v905
        %v907 = vrot.slane %v867, 2
        %v908 = vrot.slane %v868, 2
        %v909 = vsel %vm885, %v907, %v908
        %v918 = vadd.f32 %v819, %v888
        %v919 = vadd.f32 %v820, %v891
        %v920 = vadd.f32 %v821, %v894
        %v921 = vadd.f32 %v822, %v897
        %v922 = vadd.f32 %v823, %v900
        %v923 = vadd.f32 %v824, %v903
        %v924 = vadd.f32 %v825, %v906
        %v925 = vadd.f32 %v826, %v909
        %s926 = scalar_lea.vmem %s1, 56
        %v927 = vld [vmem:[%s926] sm:$0xff]
        %v929 = vrot.slane %v927, 1
        %v930 = vrot.slane %v927, 2
        %v931 = vrot.slane %v927, 3
        %v932 = vrot.slane %v927, 4
        %v933 = vrot.slane %v927, 5
        %v934 = vrot.slane %v927, 6
        %v935 = vrot.slane %v927, 7
        %v936 = vperm.slane %v927, 0
        %v937 = vperm.slane %v929, 0
        %v938 = vperm.slane %v930, 0
        %v939 = vperm.slane %v931, 0
        %v940 = vperm.slane %v932, 0
        %v941 = vperm.slane %v933, 0
        %v942 = vperm.slane %v934, 0
        %v943 = vperm.slane %v935, 0
        %944 = vrot.lane.b32.xlu0 %v936, 1
        %v945 = vpop.permute.xlu0 %944
        %946 = vrot.lane.b32.xlu0 %v937, 1
        %v947 = vpop.permute.xlu0 %946
        %948 = vrot.lane.b32.xlu0 %v938, 1
        %v949 = vpop.permute.xlu0 %948
        %950 = vrot.lane.b32.xlu0 %v939, 1
        %v951 = vpop.permute.xlu0 %950
        %952 = vrot.lane.b32.xlu0 %v940, 1
        %v953 = vpop.permute.xlu0 %952
        %954 = vrot.lane.b32.xlu0 %v941, 1
        %v955 = vpop.permute.xlu0 %954
        %956 = vrot.lane.b32.xlu0 %v942, 1
        %v957 = vpop.permute.xlu0 %956
        %958 = vrot.lane.b32.xlu0 %v943, 1
        %v959 = vpop.permute.xlu0 %958
        %v968 = vmul.f32 %v239, %v945
        %v969 = vmul.f32 %v240, %v945
        %v970 = vmul.f32 %v241, %v947
        %v971 = vmul.f32 %v242, %v947
        %v972 = vmul.f32 %v243, %v949
        %v973 = vmul.f32 %v244, %v949
        %v974 = vmul.f32 %v245, %v951
        %v975 = vmul.f32 %v246, %v951
        %v976 = vmul.f32 %v247, %v953
        %v977 = vmul.f32 %v248, %v953
        %v978 = vmul.f32 %v249, %v955
        %v979 = vmul.f32 %v250, %v955
        %v980 = vmul.f32 %v251, %v957
        %v981 = vmul.f32 %v252, %v957
        %v982 = vmul.f32 %v253, %v959
        %v983 = vmul.f32 %v254, %v959
        %v1000 = vrot.slane %v968, 2
        %v1001 = vrot.slane %v969, 2
        %v1002 = vsel %vm885, %v1000, %v1001
        %v1003 = vrot.slane %v970, 2
        %v1004 = vrot.slane %v971, 2
        %v1005 = vsel %vm885, %v1003, %v1004
        %v1006 = vrot.slane %v972, 2
        %v1007 = vrot.slane %v973, 2
        %v1008 = vsel %vm885, %v1006, %v1007
        %v1009 = vrot.slane %v974, 2
        %v1010 = vrot.slane %v975, 2
        %v1011 = vsel %vm885, %v1009, %v1010
        %v1012 = vrot.slane %v976, 2
        %v1013 = vrot.slane %v977, 2
        %v1014 = vsel %vm885, %v1012, %v1013
        %v1015 = vrot.slane %v978, 2
        %v1016 = vrot.slane %v979, 2
        %v1017 = vsel %vm885, %v1015, %v1016
        %v1018 = vrot.slane %v980, 2
        %v1019 = vrot.slane %v981, 2
        %v1020 = vsel %vm885, %v1018, %v1019
        %v1021 = vrot.slane %v982, 2
        %v1022 = vrot.slane %v983, 2
        %v1023 = vsel %vm885, %v1021, %v1022
        %1024 = vrot.lane.b32.xlu0 %v1002, 127
        %v1025 = vpop.permute.xlu0 %1024
        %1026 = vrot.lane.b32.xlu0 %v1005, 127
        %v1027 = vpop.permute.xlu0 %1026
        %1028 = vrot.lane.b32.xlu0 %v1008, 127
        %v1029 = vpop.permute.xlu0 %1028
        %1030 = vrot.lane.b32.xlu0 %v1011, 127
        %v1031 = vpop.permute.xlu0 %1030
        %1032 = vrot.lane.b32.xlu0 %v1014, 127
        %v1033 = vpop.permute.xlu0 %1032
        %1034 = vrot.lane.b32.xlu0 %v1017, 127
        %v1035 = vpop.permute.xlu0 %1034
        %1036 = vrot.lane.b32.xlu0 %v1020, 127
        %v1037 = vpop.permute.xlu0 %1036
        %1038 = vrot.lane.b32.xlu0 %v1023, 127
        %v1039 = vpop.permute.xlu0 %1038
        %v1048 = vadd.f32 %v918, %v1025
        %v1049 = vadd.f32 %v919, %v1027
        %v1050 = vadd.f32 %v920, %v1029
        %v1051 = vadd.f32 %v921, %v1031
        %v1052 = vadd.f32 %v922, %v1033
        %v1053 = vadd.f32 %v923, %v1035
        %v1054 = vadd.f32 %v924, %v1037
        %v1055 = vadd.f32 %v925, %v1039
        %s1056 = scalar_lea.vmem %s1, 64
        %v1057 = vld [vmem:[%s1056] sm:$0xff]
        %v1059 = vrot.slane %v1057, 1
        %v1060 = vrot.slane %v1057, 2
        %v1061 = vrot.slane %v1057, 3
        %v1062 = vrot.slane %v1057, 4
        %v1063 = vrot.slane %v1057, 5
        %v1064 = vrot.slane %v1057, 6
        %v1065 = vrot.slane %v1057, 7
        %v1066 = vperm.slane %v1057, 0
        %v1067 = vperm.slane %v1059, 0
        %v1068 = vperm.slane %v1060, 0
        %v1069 = vperm.slane %v1061, 0
        %v1070 = vperm.slane %v1062, 0
        %v1071 = vperm.slane %v1063, 0
        %v1072 = vperm.slane %v1064, 0
        %v1073 = vperm.slane %v1065, 0
        %1074 = vrot.lane.b32.xlu0 %v1066, 2
        %v1075 = vpop.permute.xlu0 %1074
        %1076 = vrot.lane.b32.xlu0 %v1067, 2
        %v1077 = vpop.permute.xlu0 %1076
        %1078 = vrot.lane.b32.xlu0 %v1068, 2
        %v1079 = vpop.permute.xlu0 %1078
        %1080 = vrot.lane.b32.xlu0 %v1069, 2
        %v1081 = vpop.permute.xlu0 %1080
        %1082 = vrot.lane.b32.xlu0 %v1070, 2
        %v1083 = vpop.permute.xlu0 %1082
        %1084 = vrot.lane.b32.xlu0 %v1071, 2
        %v1085 = vpop.permute.xlu0 %1084
        %1086 = vrot.lane.b32.xlu0 %v1072, 2
        %v1087 = vpop.permute.xlu0 %1086
        %1088 = vrot.lane.b32.xlu0 %v1073, 2
        %v1089 = vpop.permute.xlu0 %1088
        %v1098 = vmul.f32 %v239, %v1075
        %v1099 = vmul.f32 %v240, %v1075
        %v1100 = vmul.f32 %v241, %v1077
        %v1101 = vmul.f32 %v242, %v1077
        %v1102 = vmul.f32 %v243, %v1079
        %v1103 = vmul.f32 %v244, %v1079
        %v1104 = vmul.f32 %v245, %v1081
        %v1105 = vmul.f32 %v246, %v1081
        %v1106 = vmul.f32 %v247, %v1083
        %v1107 = vmul.f32 %v248, %v1083
        %v1108 = vmul.f32 %v249, %v1085
        %v1109 = vmul.f32 %v250, %v1085
        %v1110 = vmul.f32 %v251, %v1087
        %v1111 = vmul.f32 %v252, %v1087
        %v1112 = vmul.f32 %v253, %v1089
        %v1113 = vmul.f32 %v254, %v1089
        %v1130 = vrot.slane %v1098, 2
        %v1131 = vrot.slane %v1099, 2
        %v1132 = vsel %vm885, %v1130, %v1131
        %v1133 = vrot.slane %v1100, 2
        %v1134 = vrot.slane %v1101, 2
        %v1135 = vsel %vm885, %v1133, %v1134
        %v1136 = vrot.slane %v1102, 2
        %v1137 = vrot.slane %v1103, 2
        %v1138 = vsel %vm885, %v1136, %v1137
        %v1139 = vrot.slane %v1104, 2
        %v1140 = vrot.slane %v1105, 2
        %v1141 = vsel %vm885, %v1139, %v1140
        %v1142 = vrot.slane %v1106, 2
        %v1143 = vrot.slane %v1107, 2
        %v1144 = vsel %vm885, %v1142, %v1143
        %v1145 = vrot.slane %v1108, 2
        %v1146 = vrot.slane %v1109, 2
        %v1147 = vsel %vm885, %v1145, %v1146
        %v1148 = vrot.slane %v1110, 2
        %v1149 = vrot.slane %v1111, 2
        %v1150 = vsel %vm885, %v1148, %v1149
        %v1151 = vrot.slane %v1112, 2
        %v1152 = vrot.slane %v1113, 2
        %v1153 = vsel %vm885, %v1151, %v1152
        %1154 = vrot.lane.b32.xlu0 %v1132, 126
        %v1155 = vpop.permute.xlu0 %1154
        %1156 = vrot.lane.b32.xlu0 %v1135, 126
        %v1157 = vpop.permute.xlu0 %1156
        %1158 = vrot.lane.b32.xlu0 %v1138, 126
        %v1159 = vpop.permute.xlu0 %1158
        %1160 = vrot.lane.b32.xlu0 %v1141, 126
        %v1161 = vpop.permute.xlu0 %1160
        %1162 = vrot.lane.b32.xlu0 %v1144, 126
        %v1163 = vpop.permute.xlu0 %1162
        %1164 = vrot.lane.b32.xlu0 %v1147, 126
        %v1165 = vpop.permute.xlu0 %1164
        %1166 = vrot.lane.b32.xlu0 %v1150, 126
        %v1167 = vpop.permute.xlu0 %1166
        %1168 = vrot.lane.b32.xlu0 %v1153, 126
        %v1169 = vpop.permute.xlu0 %1168
        %v1178 = vadd.f32 %v1048, %v1155
        %v1179 = vadd.f32 %v1049, %v1157
        %v1180 = vadd.f32 %v1050, %v1159
        %v1181 = vadd.f32 %v1051, %v1161
        %v1182 = vadd.f32 %v1052, %v1163
        %v1183 = vadd.f32 %v1053, %v1165
        %v1184 = vadd.f32 %v1054, %v1167
        %v1185 = vadd.f32 %v1055, %v1169
        %v1186 = vrot.slane %v1180, 4
        %vm1187 = vcmask 1047556
        %v1188 = vsel %vm1187, %v1186, %v1178
        %v1189 = vrot.slane %v1178, 4
        %v1190 = vsel %vm1187, %v1180, %v1189
        %v1192 = vunpack.c.l.s4 1983009808
        %v1193 = vunpack.c.0.s8 %v1192
        %v1194 = vperm.slane %v1188, %v1193
        %v1196 = vunpack.c.l.s4 1983009808
        %v1197 = vunpack.c.0.s8 %v1196
        %v1198 = vperm.slane %v1190, %v1197
        %v1199 = vrot.slane %v1181, 4
        %v1200 = vsel %vm1187, %v1199, %v1179
        %v1201 = vrot.slane %v1179, 4
        %v1202 = vsel %vm1187, %v1181, %v1201
        %v1204 = vunpack.c.l.s4 1983009808
        %v1205 = vunpack.c.0.s8 %v1204
        %v1206 = vperm.slane %v1200, %v1205
        %v1208 = vunpack.c.l.s4 1983009808
        %v1209 = vunpack.c.0.s8 %v1208
        %v1210 = vperm.slane %v1202, %v1209
        %v1211 = vrot.slane %v1184, 4
        %v1212 = vsel %vm1187, %v1211, %v1182
        %v1213 = vrot.slane %v1182, 4
        %v1214 = vsel %vm1187, %v1184, %v1213
        %v1216 = vunpack.c.l.s4 1983009808
        %v1217 = vunpack.c.0.s8 %v1216
        %v1218 = vperm.slane %v1212, %v1217
        %v1220 = vunpack.c.l.s4 1983009808
        %v1221 = vunpack.c.0.s8 %v1220
        %v1222 = vperm.slane %v1214, %v1221
        %v1223 = vrot.slane %v1185, 4
        %v1224 = vsel %vm1187, %v1223, %v1183
        %v1225 = vrot.slane %v1183, 4
        %v1226 = vsel %vm1187, %v1185, %v1225
        %v1228 = vunpack.c.l.s4 1983009808
        %v1229 = vunpack.c.0.s8 %v1228
        %v1230 = vperm.slane %v1224, %v1229
        %v1232 = vunpack.c.l.s4 1983009808
        %v1233 = vunpack.c.0.s8 %v1232
        %v1234 = vperm.slane %v1226, %v1233
        %v1235 = vrot.slane %v1206, 4
        %v1236 = vsel %vm1187, %v1235, %v1194
        %v1237 = vrot.slane %v1194, 4
        %v1238 = vsel %vm1187, %v1206, %v1237
        %v1240 = vunpack.c.l.s4 1934713408
        %v1241 = vunpack.c.0.s8 %v1240
        %v1242 = vperm.slane %v1236, %v1241
        %v1244 = vunpack.c.l.s4 1934713408
        %v1245 = vunpack.c.0.s8 %v1244
        %v1246 = vperm.slane %v1238, %v1245
        %v1247 = vrot.slane %v1210, 4
        %v1248 = vsel %vm1187, %v1247, %v1198
        %v1249 = vrot.slane %v1198, 4
        %v1250 = vsel %vm1187, %v1210, %v1249
        %v1252 = vunpack.c.l.s4 1934713408
        %v1253 = vunpack.c.0.s8 %v1252
        %v1254 = vperm.slane %v1248, %v1253
        %v1256 = vunpack.c.l.s4 1934713408
        %v1257 = vunpack.c.0.s8 %v1256
        %v1258 = vperm.slane %v1250, %v1257
        %v1259 = vrot.slane %v1230, 4
        %v1260 = vsel %vm1187, %v1259, %v1218
        %v1261 = vrot.slane %v1218, 4
        %v1262 = vsel %vm1187, %v1230, %v1261
        %v1264 = vunpack.c.l.s4 1934713408
        %v1265 = vunpack.c.0.s8 %v1264
        %v1266 = vperm.slane %v1260, %v1265
        %v1268 = vunpack.c.l.s4 1934713408
        %v1269 = vunpack.c.0.s8 %v1268
        %v1270 = vperm.slane %v1262, %v1269
        %v1271 = vrot.slane %v1234, 4
        %v1272 = vsel %vm1187, %v1271, %v1222
        %v1273 = vrot.slane %v1222, 4
        %v1274 = vsel %vm1187, %v1234, %v1273
        %v1276 = vunpack.c.l.s4 1934713408
        %v1277 = vunpack.c.0.s8 %v1276
        %v1278 = vperm.slane %v1272, %v1277
        %v1280 = vunpack.c.l.s4 1934713408
        %v1281 = vunpack.c.0.s8 %v1280
        %v1282 = vperm.slane %v1274, %v1281
        %v1283 = vrot.slane %v1266, 4
        %v1284 = vsel %vm1187, %v1283, %v1242
        %v1285 = vrot.slane %v1242, 4
        %v1286 = vsel %vm1187, %v1266, %v1285
        %v1287 = vrot.slane %v1270, 4
        %v1288 = vsel %vm1187, %v1287, %v1246
        %v1289 = vrot.slane %v1246, 4
        %v1290 = vsel %vm1187, %v1270, %v1289
        %v1291 = vrot.slane %v1278, 4
        %v1292 = vsel %vm1187, %v1291, %v1254
        %v1293 = vrot.slane %v1254, 4
        %v1294 = vsel %vm1187, %v1278, %v1293
        %v1295 = vrot.slane %v1282, 4
        %v1296 = vsel %vm1187, %v1295, %v1258
        %v1297 = vrot.slane %v1258, 4
        %v1298 = vsel %vm1187, %v1282, %v1297
        %1300 = vrot.lane.b32.xlu0 %v1286, 16
        %v1301 = vpop.permute.xlu0 %1300
        %1304 = vrot.lane.b32.xlu0 %v1288, 32
        %v1305 = vpop.permute.xlu0 %1304
        %1308 = vrot.lane.b32.xlu0 %v1290, 48
        %v1309 = vpop.permute.xlu0 %1308
        %1312 = vrot.lane.b32.xlu0 %v1292, 64
        %v1313 = vpop.permute.xlu0 %1312
        %1316 = vrot.lane.b32.xlu0 %v1294, 80
        %v1317 = vpop.permute.xlu0 %1316
        %1320 = vrot.lane.b32.xlu0 %v1296, 96
        %v1321 = vpop.permute.xlu0 %1320
        %1324 = vrot.lane.b32.xlu0 %v1298, 112
        %v1325 = vpop.permute.xlu0 %1324
        %vm1327 = vcmask 130048
        %v1328 = vsel %vm1327, %v1284, %v1301
        %vm1329 = vcmask 261120
        %v1330 = vsel %vm1329, %v1328, %v1305
        %vm1331 = vcmask 392192
        %v1332 = vsel %vm1331, %v1330, %v1309
        %vm1333 = vcmask 523264
        %v1334 = vsel %vm1333, %v1332, %v1313
        %vm1335 = vcmask 654336
        %v1336 = vsel %vm1335, %v1334, %v1317
        %vm1337 = vcmask 785408
        %v1338 = vsel %vm1337, %v1336, %v1321
        %vm1339 = vcmask 916480
        %v1340 = vsel %vm1339, %v1338, %v1325
        %v1341 = vld [vmem:[%s2] sm:$0xff]
        %1343 = vset.pattern.permute.xlu0 0
        %1344 = vperm.xlu0 %1343, %v1341
        %v1345 = vpop.permute.xlu0 %1344
        %v1347 = vadd.f32 %v1340, %v1345
        %v1348 = vmax.f32 %v1347, 0.0
        %v1349 = vmin.f32 %v1348, 6.0
        %v1350 = vld [vmem:[%s3] sm:$0xff]
        %v1351 = vld [vmem:[%s3 + $0x8] sm:$0xff]
        %v1352 = vld [vmem:[%s4] sm:$0xff]
        %v1353 = vld [vmem:[%s4 + $0x8] sm:$0xff]
        %1355 = vset.pattern.permute.xlu0 0
        %1356 = vperm.xlu0 %1355, %v1352
        %v1357 = vpop.permute.xlu0 %1356
        %1360 = vset.pattern.permute.xlu0 0
        %1361 = vperm.xlu0 %1360, %v1353
        %v1362 = vpop.permute.xlu0 %1361
        %vm1364 = vcmask 64512
        %v1366 = vsel %vm1364, %v1350, 0
        %v1369 = vsel %vm1364, %v1351, 0
        %1371 = vmatpush.msra.mxu0 0.0
        %1372 = vmatpush.msra.mxu0 0.0
        %1373 = vmatpush.msra.mxu0 0.0
        %1374 = vmatpush.msra.mxu0 0.0
        %1375 = vmatpush.msra.mxu0 0.0
        %1376 = vmatpush.msra.mxu0 0.0
        %1377 = vmatpush.msra.mxu0 0.0
        %1378 = vmatpush.msra.mxu0 0.0
        %1379 = vmatpush.msra.mxu0 0.0
        %1380 = vmatpush.msra.mxu0 0.0
        %1381 = vmatpush.msra.mxu0 0.0
        %1382 = vmatpush.msra.mxu0 0.0
        %1383 = vmatpush.msra.mxu0 0.0
        %1384 = vmatpush.msra.mxu0 0.0
        %1385 = vmatpush.msra.mxu0 0.0
        %1386 = vmatpush.msra.mxu0 %v1349
        %1387 = vmatmul.f32.gmra.mxu0 %v1366
        %v1388 = vpop.f32.mrf.mxu0
        %v1389 = vadd.f32 %v1357, %v1388
        %1390 = vmatmul.f32.gmra.mxu0 %v1369
        %v1391 = vpop.f32.mrf.mxu0
        %v1392 = vadd.f32 %v1362, %v1391
        %1393 = vdwg.mxu0
        %v1394 = vmax.f32 %v1389, 0.0
        %v1395 = vmax.f32 %v1392, 0.0
        %v1396 = vmin.f32 %v1394, 6.0
        %v1397 = vmin.f32 %v1395, 6.0
        %1398 = vst [vmem:[%s231] sm:$0xff] %v1396
        %1399 = vst [vmem:[%s231 + $0x8] sm:$0xff] %v1397
        %s1400 = sand.u32 %s151, 1
        %s1401 = scalar_lea.sflag [#allocation3], %s1400
        %s1402 = sand.u32 %s151, 1
        %s1403 = smul.addr %s1402, 16
        %s1404 = scalar_lea.vmem [#allocation2], %s1403
        // Predicated region
        $region41: #{tpu_custom_call.1} parent=39 // pred_check
          %p1405 = pneg %p161
        $region42: #{tpu_custom_call.1} parent=39 // pred_check_branch
          %1407 = sbr.rel (%p1405) target = $region44
        $region43: #{tpu_custom_call.1} parent=39 // pred_region
          %1409 = vsyncadd %s1401, 0
          %s1410 = smul.addr %s23, 4
          %s1411 = sadd.s32 %s24, %s1410
          %s1412 = smul.addr %s1411, 8
          %s1413 = scalar_lea.hbm %s5, %s1412
          %s1414 = sshll.u32 %s1404, 4
          %s1415 = int_to_ptr.vmem [resolvable:$true] %s1414
          %s1416 = sshll.u32 %s1413, 4
          %s1417 = int_to_ptr.hbm [resolvable:$true] %s1416
          %1422 = dma.vmem_to_hbm [thread:$0]  %s1415, 256, %s1417, %s1401, 128, 256, 8
        $region44: #{tpu_custom_call.1} parent=39 // pred_fallthru
          _
      $region40: #{tpu_custom_call.1} parent=5 // pred_fallthru
        _
      %p1423 = scmp.le.s32.totalorder 2, %s14
      // Predicated region
      $region45: #{tpu_custom_call.1} parent=5 // pred_check
        %p1424 = pneg %p1423
      $region46: #{tpu_custom_call.1} parent=5 // pred_check_branch
        %1426 = sbr.rel (%p1424) target = $region48
      $region47: #{tpu_custom_call.1} parent=5 // pred_region
        %s1427 = ssub.s32 %s14, 2
        // Predicated region
        $region49: #{tpu_custom_call.1} parent=47 // pred_check
          %p1428 = pneg %p167
        $region50: #{tpu_custom_call.1} parent=47 // pred_check_branch
          %1430 = sbr.rel (%p1428) target = $region52
        $region51: #{tpu_custom_call.1} parent=47 // pred_region
          %s1431 = sand.u32 %s152, 1
          %s1432 = scalar_lea.sflag [#allocation3], %s1431
          %s1433 = sand.u32 %s152, 1
          %s1434 = smul.addr %s1433, 16
          %s1435 = scalar_lea.vmem [#allocation2], %s1434
          %1437 = dma.done %s1432, 256
        $region52: #{tpu_custom_call.1} parent=47 // pred_fallthru
          _
      $region48: #{tpu_custom_call.1} parent=5 // pred_fallthru
        _
    $region6: #{tpu_custom_call.1} parent=1 // loop_footer
      %s18 = sadd.s32 1, %s14
    $region7: #{tpu_custom_call.1} parent=1 // loop_footer_branch
      %13 = sbr.rel target = $region3
    $region8: #{tpu_custom_call.1} parent=1 // loop_exit
      _
    %1438 = vsyncpa [#allocation3], 1
    %s1439 = scalar_lea.sflag [#allocation3], 1
    %1440 = vsyncpa %s1439, 1

</llo_original>
